<compile_context>
chip_gen: v6e
topology: v6e:2x2x1
jax: 0.10.0
libtpu: 0.0.40
codegen_flags: <defaults>
</compile_context>

<pallas_src>
import functools

import jax
import jax.numpy as jnp
import numpy as np
from jax.experimental import pallas as pl
from jax.experimental.pallas import tpu as pltpu


_NEG = -1e30  # log(0) stand-in; jnp.exp(_NEG) underflows to exactly 0.0 in f32.


def _transitioner_kernel(x_ref, w_ref, o_ref, *, ks, wp, qp):
    """Whole-batch Transitioner forward in one grid step.

    x_ref: (N*Cin, L)              'same'-padded, flattened log-prob images
                                   (lane axis = flat padded spatial, rows = (b, c))
    w_ref: (N*F, K = ks*ks*N*Cin)  probability kernel, block-diagonal over the
                                   batch, column order (kh, kw, b, c)
    o_ref: (N*F, Qp = rnd128(OH*Wp)) log-prob outputs, rows = (b, f), lane-dense
    """
    # exp(x) once for the whole batch (single EUP pass over 4 vregs).
    ex = jnp.exp(x_ref[...])                              # (N*Cin, L) probabilities

    # im2col: in the flattened layout a (kh, kw) conv tap is just a lane offset
    # of kh*Wp + kw, and because the batch lives on sublanes each tap slice is a
    # full (N*Cin, Qp) tile-aligned block -> the concat is pure vreg assembly
    # (lane rotates only, on the otherwise idle XLU slot).
    blocks = []
    for kh in range(ks):
        for kw in range(ks):
            off = kh * wp + kw
            blocks.append(ex[:, off:off + qp])            # (N*Cin, Qp)
    patch = jnp.concatenate(blocks, axis=0)               # (ks*ks*N*Cin, Qp)

    # One MXU matmul for the whole batch; log epilogue; one unmasked,
    # lane-dense (N*F, Qp) store.
    acc = jnp.dot(w_ref[...], patch, preferred_element_type=jnp.float32)
    o_ref[...] = jnp.log(acc).astype(o_ref.dtype)


def _round_up(x, m):
    return (x + m - 1) // m * m


@functools.partial(jax.jit, static_argnames=("padding",))
def transitioner_forward(x_nchw, log_kernel, padding="same"):
    """Pallas TPU forward of Transitioner.

    x_nchw:     (N, Cin, H, W) float32 log-probabilities.
    log_kernel: (F, Cin, ks, ks) raw kernel parameter (self.kernel).
    Returns y = (N, F, OH, OW) log-probabilities.
    """
    assert padding in ("same", "valid")
    fnum, cin, ks, _ = log_kernel.shape
    nbatch, _, h, w = x_nchw.shape

    pad = (ks - 1) // 2 if padding == "same" else 0
    hp, wp = h + 2 * pad, w + 2 * pad
    oh, ow = hp - ks + 1, wp - ks + 1
    q = oh * wp                                # flat output width on the padded grid
    qp = _round_up(q, 128)                     # lane-dense output width (unmasked vst)
    max_off = (ks - 1) * wp + (ks - 1)         # largest tap lane offset
    l = _round_up(max(hp * wp, max_off + qp), 128)   # flat input length per image

    # --- parameter glue (Transitioner.forward): normalize over the filter dim,
    # exponentiate, and expand block-diagonally over the batch so one matmul
    # handles all images.  Columns ordered (kh, kw, b, c) to match patch rows.
    lk = log_kernel - jax.nn.logsumexp(log_kernel, axis=0, keepdims=True)
    w_prob = jnp.exp(lk)                                            # (F, Cin, ks, ks)
    w2 = jnp.transpose(w_prob, (0, 2, 3, 1)).reshape(fnum, ks * ks, cin)
    eye = jnp.eye(nbatch, dtype=w2.dtype)
    w_big = jnp.einsum("bq,ftc->bftqc", eye, w2).reshape(
        nbatch * fnum, ks * ks * nbatch * cin)

    # Zero-probability padding in log space, flatten spatial so the lane axis is
    # the wide flat spatial dim, batch*channels on sublanes.  No transposes.
    xp = jnp.pad(x_nchw, ((0, 0), (0, 0), (pad, pad), (pad, pad)),
                 constant_values=_NEG)
    xf = xp.reshape(nbatch * cin, hp * wp)
    xf = jnp.pad(xf, ((0, 0), (0, l - hp * wp)), constant_values=_NEG)

    k = ks * ks * nbatch * cin
    out_flat = pl.pallas_call(
        functools.partial(_transitioner_kernel, ks=ks, wp=wp, qp=qp),
        out_shape=jax.ShapeDtypeStruct((nbatch * fnum, qp), x_nchw.dtype),
        grid_spec=pltpu.PrefetchScalarGridSpec(
            num_scalar_prefetch=0,
            grid=(1,),                         # whole (tiny) batch in one step
            in_specs=[
                pl.BlockSpec((nbatch * cin, l), lambda i: (0, 0)),
                pl.BlockSpec((nbatch * fnum, k), lambda i: (0, 0)),
            ],
            out_specs=pl.BlockSpec((nbatch * fnum, qp), lambda i: (0, 0)),
        ),
        compiler_params=pltpu.CompilerParams(
            dimension_semantics=("arbitrary",)),
    )(xf, w_big)

    # Crop the flat padded-width grid back to NCHW: rows (b, f); flat index
    # i*wp + j, keep j < ow; lanes >= q are alignment padding.
    y = out_flat.reshape(nbatch, fnum, qp)[:, :, :q]
    y = y.reshape(nbatch, fnum, oh, wp)[..., :ow]
    return y


if __name__ == "__main__":
    key = jax.random.PRNGKey(0)
    kx, kk = jax.random.split(key)

    N, CIN, H, W = 2, 4, 16, 16
    FNUM, KSIZE = 8, 3

    # Input in log-probability space (channel-wise log-softmax for realism).
    x_raw = jax.random.normal(kx, (N, CIN, H, W), dtype=jnp.float32)
    x = jax.nn.log_softmax(x_raw, axis=1)

    # Small deterministic perturbation so the logsumexp normalization path is
    # exercised non-trivially (module init would be all-equal logits).
    log_kernel = 0.1 * jax.random.normal(kk, (FNUM, CIN, KSIZE, KSIZE),
                                         dtype=jnp.float32)

    y = transitioner_forward(x, log_kernel, padding="same")
    y = jax.block_until_ready(y)

    # Pure-JAX reference: conv2d(exp(x), prob_kernel, padding='same').log()
    lk_ref = log_kernel - jax.nn.logsumexp(log_kernel, axis=0, keepdims=True)
    w_prob_ref = jnp.exp(lk_ref)
    pad = (KSIZE - 1) // 2
    ref = jnp.log(jax.lax.conv_general_dilated(
        jnp.exp(x), w_prob_ref, window_strides=(1, 1),
        padding=((pad, pad), (pad, pad)),
        dimension_numbers=("NCHW", "OIHW", "NCHW")))
    np.testing.assert_allclose(np.asarray(y), np.asarray(ref),
                               rtol=1e-5, atol=1e-5)

    print("KERNEL_OK")
</pallas_src>

<mosaic_0001>
module attributes {stable_mosaic.version = 11 : i64} {
  func.func @_transitioner_kernel(%arg0: i32, %arg1: memref<8x512xf32, #tpu.memory_space<vmem>>, %arg2: memref<16x72xf32, #tpu.memory_space<vmem>>, %arg3: memref<16x384xf32, #tpu.memory_space<vmem>>) attributes {dimension_semantics = [#tpu.dimension_semantics<arbitrary>], iteration_bounds = array<i64: 1>, scalar_prefetch = 0 : i64, scratch_operands = 0 : i64, tpu.core_type = #tpu.core_type<tc>, window_params = [{pipeline_mode = #tpu.pipeline_mode<synchronous>, transform_indices = @transform_0, window_bounds = array<i64: 8, 512>}, {pipeline_mode = #tpu.pipeline_mode<synchronous>, transform_indices = @transform_1, window_bounds = array<i64: 16, 72>}, {pipeline_mode = #tpu.pipeline_mode<synchronous>, transform_indices = @transform_2, window_bounds = array<i64: 16, 384>}]} {
    %c0 = arith.constant 0 : index
    %c0_0 = arith.constant 0 : index
    %0 = vector.load %arg1[%c0, %c0_0] : memref<8x512xf32, #tpu.memory_space<vmem>>, vector<8x512xf32>
    %1 = math.exp %0 : vector<8x512xf32>
    %2 = vector.extract_strided_slice %1 {offsets = [0, 0], sizes = [8, 384], strides = [1, 1]} : vector<8x512xf32> to vector<8x384xf32>
    %3 = vector.extract_strided_slice %1 {offsets = [0, 1], sizes = [8, 384], strides = [1, 1]} : vector<8x512xf32> to vector<8x384xf32>
    %4 = vector.extract_strided_slice %1 {offsets = [0, 2], sizes = [8, 384], strides = [1, 1]} : vector<8x512xf32> to vector<8x384xf32>
    %5 = vector.extract_strided_slice %1 {offsets = [0, 18], sizes = [8, 384], strides = [1, 1]} : vector<8x512xf32> to vector<8x384xf32>
    %6 = vector.extract_strided_slice %1 {offsets = [0, 19], sizes = [8, 384], strides = [1, 1]} : vector<8x512xf32> to vector<8x384xf32>
    %7 = vector.extract_strided_slice %1 {offsets = [0, 20], sizes = [8, 384], strides = [1, 1]} : vector<8x512xf32> to vector<8x384xf32>
    %8 = vector.extract_strided_slice %1 {offsets = [0, 36], sizes = [8, 384], strides = [1, 1]} : vector<8x512xf32> to vector<8x384xf32>
    %9 = vector.extract_strided_slice %1 {offsets = [0, 37], sizes = [8, 384], strides = [1, 1]} : vector<8x512xf32> to vector<8x384xf32>
    %10 = vector.extract_strided_slice %1 {offsets = [0, 38], sizes = [8, 384], strides = [1, 1]} : vector<8x512xf32> to vector<8x384xf32>
    %11 = tpu.concatenate %2, %3, %4, %5, %6, %7, %8, %9, %10 in 0 : vector<8x384xf32>, vector<8x384xf32>, vector<8x384xf32>, vector<8x384xf32>, vector<8x384xf32>, vector<8x384xf32>, vector<8x384xf32>, vector<8x384xf32>, vector<8x384xf32> -> vector<72x384xf32>
    %c0_1 = arith.constant 0 : index
    %c0_2 = arith.constant 0 : index
    %12 = vector.load %arg2[%c0_1, %c0_2] : memref<16x72xf32, #tpu.memory_space<vmem>>, vector<16x72xf32>
    %cst = arith.constant dense<0.000000e+00> : vector<16x384xf32>
    %13 = tpu.matmul %12, %11, %cst {dimension_numbers = #tpu.dot_dimension_numbers<[1], [0], [0], [1], [0, 0, 1, 1], [], []>} : vector<16x72xf32>, vector<72x384xf32>, vector<16x384xf32> -> vector<16x384xf32>
    %14 = math.log %13 : vector<16x384xf32>
    %c0_3 = arith.constant 0 : index
    %c0_4 = arith.constant 0 : index
    %15 = vector.load %arg3[%c0_3, %c0_4] : memref<16x384xf32, #tpu.memory_space<vmem>>, vector<16x384xf32>
    tpu.vector_store %arg3[%c0_3, %c0_4], %14 {strides = array<i32>} : memref<16x384xf32, #tpu.memory_space<vmem>>, vector<16x384xf32>,
    return
  }
  func.func @transform_0(%arg0: i32) -> (i32, i32) {
    %c0_i32 = arith.constant 0 : i32
    %c0_i32_0 = arith.constant 0 : i32
    %c0_i32_1 = arith.constant 0 : i32
    return %c0_i32, %c0_i32_0 : i32, i32
  }
  func.func @transform_1(%arg0: i32) -> (i32, i32) {
    %c0_i32 = arith.constant 0 : i32
    %c0_i32_0 = arith.constant 0 : i32
    %c0_i32_1 = arith.constant 0 : i32
    return %c0_i32, %c0_i32_0 : i32, i32
  }
  func.func @transform_2(%arg0: i32) -> (i32, i32) {
    %c0_i32 = arith.constant 0 : i32
    %c0_i32_0 = arith.constant 0 : i32
    %c0_i32_1 = arith.constant 0 : i32
    return %c0_i32, %c0_i32_0 : i32, i32
  }
}

</mosaic_0001>

<llo_original>
// kernel: transitioner_forward.1
$region0: #{transitioner_forward.1}
  #allocation0 [shape = 'u32[]', space=smem, size = 0x4, offset = 0x4, fixed_abs, tag = 'smem constant byte address 0x4 - core index']
  #allocation1 [shape = 'u32[144,128]{1,0:T(1,128)}', space=vmem, size = 0x12000, scoped, tag = 'internal scratch']
  %s0 = inlined_call_operand.vmem [shape: f32[8,512], index: 0, kind: input, shape index: {}]
  %s1 = inlined_call_operand.vmem [shape: f32[16,72], index: 1, kind: input, shape index: {}]
  %s2 = inlined_call_operand.vmem [shape: f32[16,384], index: 2, kind: output, shape index: {}]
  %s3 = sld [smem:[#allocation0]]
  $region18: #{transitioner_forward.1} parent=0
    _
  %s5 = ssub.s32 1, %s3
  %s6 = scalar_select 0, %s5, %s3
  // Predicated region
  $region2: #{transitioner_forward.1} parent=0 // pred_check
    _
  $region3: #{transitioner_forward.1} parent=0 // pred_check_branch
    %8 = sbr.rel (0) target = $region5
  $region4: #{transitioner_forward.1} parent=0 // pred_region
    _
  $region5: #{transitioner_forward.1} parent=0 // pred_fallthru
    _
  // Predicated region
  $region6: #{transitioner_forward.1} parent=0 // pred_check
    _
  $region7: #{transitioner_forward.1} parent=0 // pred_check_branch
    %10 = sbr.rel (0) target = $region9
  $region8: #{transitioner_forward.1} parent=0 // pred_region
    _
  $region9: #{transitioner_forward.1} parent=0 // pred_fallthru
    _
  %v11 = vld [vmem:[%s0] sm:$0xff]
  %v12 = vld [vmem:[%s0 + $0x8] sm:$0xff]
  %v13 = vld [vmem:[%s0 + $0x10] sm:$0xff]
  %v14 = vld [vmem:[%s0 + $0x18] sm:$0xff]
  %v15 = vmul.f32 %v11, 1.442695
  %v16 = vpow.pop %v15
  %v17 = vmul.f32 %v12, 1.442695
  %v18 = vpow.pop %v17
  %v19 = vmul.f32 %v13, 1.442695
  %v20 = vpow.pop %v19
  %v21 = vmul.f32 %v14, 1.442695
  %v22 = vpow.pop %v21
  %27 = vrot.lane.b32.xlu0 %v16, 127
  %v28 = vpop.permute.xlu0 %27
  %29 = vrot.lane.b32.xlu0 %v18, 127
  %v30 = vpop.permute.xlu0 %29
  %31 = vrot.lane.b32.xlu0 %v20, 127
  %v32 = vpop.permute.xlu0 %31
  %33 = vrot.lane.b32.xlu0 %v22, 127
  %v34 = vpop.permute.xlu0 %33
  %vm35 = vcmask 1039360
  %v36 = vsel %vm35, %v28, %v30
  %v37 = vsel %vm35, %v30, %v32
  %v38 = vsel %vm35, %v32, %v34
  %42 = vrot.lane.b32.xlu0 %v16, 126
  %v43 = vpop.permute.xlu0 %42
  %44 = vrot.lane.b32.xlu0 %v18, 126
  %v45 = vpop.permute.xlu0 %44
  %46 = vrot.lane.b32.xlu0 %v20, 126
  %v47 = vpop.permute.xlu0 %46
  %48 = vrot.lane.b32.xlu0 %v22, 126
  %v49 = vpop.permute.xlu0 %48
  %vm50 = vcmask 1031168
  %v51 = vsel %vm50, %v43, %v45
  %v52 = vsel %vm50, %v45, %v47
  %v53 = vsel %vm50, %v47, %v49
  %57 = vrot.lane.b32.xlu0 %v16, 110
  %v58 = vpop.permute.xlu0 %57
  %59 = vrot.lane.b32.xlu0 %v18, 110
  %v60 = vpop.permute.xlu0 %59
  %61 = vrot.lane.b32.xlu0 %v20, 110
  %v62 = vpop.permute.xlu0 %61
  %63 = vrot.lane.b32.xlu0 %v22, 110
  %v64 = vpop.permute.xlu0 %63
  %vm65 = vcmask 900096
  %v66 = vsel %vm65, %v58, %v60
  %v67 = vsel %vm65, %v60, %v62
  %v68 = vsel %vm65, %v62, %v64
  %72 = vrot.lane.b32.xlu0 %v16, 109
  %v73 = vpop.permute.xlu0 %72
  %74 = vrot.lane.b32.xlu0 %v18, 109
  %v75 = vpop.permute.xlu0 %74
  %76 = vrot.lane.b32.xlu0 %v20, 109
  %v77 = vpop.permute.xlu0 %76
  %78 = vrot.lane.b32.xlu0 %v22, 109
  %v79 = vpop.permute.xlu0 %78
  %vm80 = vcmask 891904
  %v81 = vsel %vm80, %v73, %v75
  %v82 = vsel %vm80, %v75, %v77
  %v83 = vsel %vm80, %v77, %v79
  %87 = vrot.lane.b32.xlu0 %v16, 108
  %v88 = vpop.permute.xlu0 %87
  %89 = vrot.lane.b32.xlu0 %v18, 108
  %v90 = vpop.permute.xlu0 %89
  %91 = vrot.lane.b32.xlu0 %v20, 108
  %v92 = vpop.permute.xlu0 %91
  %93 = vrot.lane.b32.xlu0 %v22, 108
  %v94 = vpop.permute.xlu0 %93
  %vm95 = vcmask 883712
  %v96 = vsel %vm95, %v88, %v90
  %v97 = vsel %vm95, %v90, %v92
  %v98 = vsel %vm95, %v92, %v94
  %102 = vrot.lane.b32.xlu0 %v16, 92
  %v103 = vpop.permute.xlu0 %102
  %104 = vrot.lane.b32.xlu0 %v18, 92
  %v105 = vpop.permute.xlu0 %104
  %106 = vrot.lane.b32.xlu0 %v20, 92
  %v107 = vpop.permute.xlu0 %106
  %108 = vrot.lane.b32.xlu0 %v22, 92
  %v109 = vpop.permute.xlu0 %108
  %vm110 = vcmask 752640
  %v111 = vsel %vm110, %v103, %v105
  %v112 = vsel %vm110, %v105, %v107
  %v113 = vsel %vm110, %v107, %v109
  %117 = vrot.lane.b32.xlu0 %v16, 91
  %v118 = vpop.permute.xlu0 %117
  %119 = vrot.lane.b32.xlu0 %v18, 91
  %v120 = vpop.permute.xlu0 %119
  %121 = vrot.lane.b32.xlu0 %v20, 91
  %v122 = vpop.permute.xlu0 %121
  %123 = vrot.lane.b32.xlu0 %v22, 91
  %v124 = vpop.permute.xlu0 %123
  %vm125 = vcmask 744448
  %v126 = vsel %vm125, %v118, %v120
  %v127 = vsel %vm125, %v120, %v122
  %v128 = vsel %vm125, %v122, %v124
  %132 = vrot.lane.b32.xlu0 %v16, 90
  %v133 = vpop.permute.xlu0 %132
  %134 = vrot.lane.b32.xlu0 %v18, 90
  %v135 = vpop.permute.xlu0 %134
  %136 = vrot.lane.b32.xlu0 %v20, 90
  %v137 = vpop.permute.xlu0 %136
  %138 = vrot.lane.b32.xlu0 %v22, 90
  %v139 = vpop.permute.xlu0 %138
  %vm140 = vcmask 736256
  %v141 = vsel %vm140, %v133, %v135
  %v142 = vsel %vm140, %v135, %v137
  %v143 = vsel %vm140, %v137, %v139
  %v147 = vld [vmem:[%s1] sm:$0xff]
  %v148 = vld [vmem:[%s1 + $0x8] sm:$0xff]
  %vm149 = vcmask 588800
  %v151 = vsel %vm149, %v147, 0
  %v154 = vsel %vm149, %v148, 0
  %156 = vmatprep.subr.mxu0 0.0
  %157 = vmatpush1.msra.mxu0 0.0
  %158 = vmatprep.subr.mxu0 0.0
  %159 = vmatpush1.msra.mxu0 0.0
  %160 = vmatprep.subr.mxu0 0.0
  %161 = vmatpush1.msra.mxu0 0.0
  %162 = vmatprep.subr.mxu0 0.0
  %163 = vmatpush1.msra.mxu0 0.0
  %164 = vmatprep.subr.mxu0 0.0
  %165 = vmatpush1.msra.mxu0 0.0
  %166 = vmatprep.subr.mxu0 0.0
  %167 = vmatpush1.msra.mxu0 0.0
  %168 = vmatprep.subr.mxu0 0.0
  %169 = vmatpush1.msra.mxu0 0.0
  %170 = vmatprep.subr.mxu0 %v142
  %171 = vmatpush1.msra.mxu0 %v141
  %172 = vmatprep.subr.mxu0 %v127
  %173 = vmatpush1.msra.mxu0 %v126
  %174 = vmatprep.subr.mxu0 %v112
  %175 = vmatpush1.msra.mxu0 %v111
  %176 = vmatprep.subr.mxu0 %v97
  %177 = vmatpush1.msra.mxu0 %v96
  %178 = vmatprep.subr.mxu0 %v82
  %179 = vmatpush1.msra.mxu0 %v81
  %180 = vmatprep.subr.mxu0 %v67
  %181 = vmatpush1.msra.mxu0 %v66
  %182 = vmatprep.subr.mxu0 %v52
  %183 = vmatpush1.msra.mxu0 %v51
  %184 = vmatprep.subr.mxu0 %v37
  %185 = vmatpush1.msra.mxu0 %v36
  %186 = vmatprep.subr.mxu0 %v18
  %187 = vmatpush1.msra.mxu0 %v16
  %188 = vmatprep.subr.mxu0 0.0
  %189 = vmatpush2.msra.mxu0 0.0
  %190 = vmatprep.subr.mxu0 0.0
  %191 = vmatpush2.msra.mxu0 0.0
  %192 = vmatprep.subr.mxu0 0.0
  %193 = vmatpush2.msra.mxu0 0.0
  %194 = vmatprep.subr.mxu0 0.0
  %195 = vmatpush2.msra.mxu0 0.0
  %196 = vmatprep.subr.mxu0 0.0
  %197 = vmatpush2.msra.mxu0 0.0
  %198 = vmatprep.subr.mxu0 0.0
  %199 = vmatpush2.msra.mxu0 0.0
  %200 = vmatprep.subr.mxu0 0.0
  %201 = vmatpush2.msra.mxu0 0.0
  %202 = vmatprep.subr.mxu0 0.0
  %203 = vmatpush2.msra.mxu0 0.0
  %204 = vmatprep.subr.mxu0 0.0
  %205 = vmatpush2.msra.mxu0 0.0
  %206 = vmatprep.subr.mxu0 0.0
  %207 = vmatpush2.msra.mxu0 0.0
  %208 = vmatprep.subr.mxu0 0.0
  %209 = vmatpush2.msra.mxu0 0.0
  %210 = vmatprep.subr.mxu0 0.0
  %211 = vmatpush2.msra.mxu0 0.0
  %212 = vmatprep.subr.mxu0 0.0
  %213 = vmatpush2.msra.mxu0 0.0
  %214 = vmatprep.subr.mxu0 0.0
  %215 = vmatpush2.msra.mxu0 0.0
  %216 = vmatprep.subr.mxu0 0.0
  %217 = vmatpush2.msra.mxu0 0.0
  %218 = vmatprep.subr.mxu0 0.0
  %219 = vmatpush2.msra.mxu0 0.0
  %220 = vmatprep.mubr.f32.mxu0 0.0
  %221 = vmatmul.mubr.f32.gmra.mxu0 %v151
  %v222 = vpop.f32.mrf.mxu0
  %v223 = vadd.f32 0.0, %v222
  %v224 = vpop.f32.mrf.mxu0
  %v225 = vadd.f32 0.0, %v224
  %226 = vmatprep.mubr.f32.mxu0 0.0
  %227 = vmatmul.mubr.f32.gmra.mxu0 %v154
  %v228 = vpop.f32.mrf.mxu0
  %v229 = vadd.f32 0.0, %v228
  %v230 = vpop.f32.mrf.mxu0
  %v231 = vadd.f32 0.0, %v230
  %232 = vdwg.mxu0
  %233 = vmatprep.subr.mxu0 0.0
  %234 = vmatpush1.msra.mxu0 0.0
  %235 = vmatprep.subr.mxu0 0.0
  %236 = vmatpush1.msra.mxu0 0.0
  %237 = vmatprep.subr.mxu0 0.0
  %238 = vmatpush1.msra.mxu0 0.0
  %239 = vmatprep.subr.mxu0 0.0
  %240 = vmatpush1.msra.mxu0 0.0
  %241 = vmatprep.subr.mxu0 0.0
  %242 = vmatpush1.msra.mxu0 0.0
  %243 = vmatprep.subr.mxu0 0.0
  %244 = vmatpush1.msra.mxu0 0.0
  %245 = vmatprep.subr.mxu0 0.0
  %246 = vmatpush1.msra.mxu0 0.0
  %247 = vmatprep.subr.mxu0 0.0
  %248 = vmatpush1.msra.mxu0 %v143
  %249 = vmatprep.subr.mxu0 0.0
  %250 = vmatpush1.msra.mxu0 %v128
  %251 = vmatprep.subr.mxu0 0.0
  %252 = vmatpush1.msra.mxu0 %v113
  %253 = vmatprep.subr.mxu0 0.0
  %254 = vmatpush1.msra.mxu0 %v98
  %255 = vmatprep.subr.mxu0 0.0
  %256 = vmatpush1.msra.mxu0 %v83
  %257 = vmatprep.subr.mxu0 0.0
  %258 = vmatpush1.msra.mxu0 %v68
  %259 = vmatprep.subr.mxu0 0.0
  %260 = vmatpush1.msra.mxu0 %v53
  %261 = vmatprep.subr.mxu0 0.0
  %262 = vmatpush1.msra.mxu0 %v38
  %263 = vmatprep.subr.mxu0 0.0
  %264 = vmatpush1.msra.mxu0 %v20
  %265 = vmatprep.subr.mxu0 0.0
  %266 = vmatpush2.msra.mxu0 0.0
  %267 = vmatprep.subr.mxu0 0.0
  %268 = vmatpush2.msra.mxu0 0.0
  %269 = vmatprep.subr.mxu0 0.0
  %270 = vmatpush2.msra.mxu0 0.0
  %271 = vmatprep.subr.mxu0 0.0
  %272 = vmatpush2.msra.mxu0 0.0
  %273 = vmatprep.subr.mxu0 0.0
  %274 = vmatpush2.msra.mxu0 0.0
  %275 = vmatprep.subr.mxu0 0.0
  %276 = vmatpush2.msra.mxu0 0.0
  %277 = vmatprep.subr.mxu0 0.0
  %278 = vmatpush2.msra.mxu0 0.0
  %279 = vmatprep.subr.mxu0 0.0
  %280 = vmatpush2.msra.mxu0 0.0
  %281 = vmatprep.subr.mxu0 0.0
  %282 = vmatpush2.msra.mxu0 0.0
  %283 = vmatprep.subr.mxu0 0.0
  %284 = vmatpush2.msra.mxu0 0.0
  %285 = vmatprep.subr.mxu0 0.0
  %286 = vmatpush2.msra.mxu0 0.0
  %287 = vmatprep.subr.mxu0 0.0
  %288 = vmatpush2.msra.mxu0 0.0
  %289 = vmatprep.subr.mxu0 0.0
  %290 = vmatpush2.msra.mxu0 0.0
  %291 = vmatprep.subr.mxu0 0.0
  %292 = vmatpush2.msra.mxu0 0.0
  %293 = vmatprep.subr.mxu0 0.0
  %294 = vmatpush2.msra.mxu0 0.0
  %295 = vmatprep.subr.mxu0 0.0
  %296 = vmatpush2.msra.mxu0 0.0
  %297 = vmatprep.mubr.f32.mxu0 0.0
  %298 = vmatmul.mubr.f32.gmra.mxu0 %v151
  %v299 = vpop.f32.mrf.mxu0
  %v300 = vadd.f32 0.0, %v299
  %v301 = vpop.f32.mrf.mxu0
  %302 = vmatprep.mubr.f32.mxu0 0.0
  %303 = vmatmul.mubr.f32.gmra.mxu0 %v154
  %v304 = vpop.f32.mrf.mxu0
  %v305 = vadd.f32 0.0, %v304
  %v306 = vpop.f32.mrf.mxu0
  %307 = vdwg.mxu0
  %v308 = vlog2.pop %v223
  %v309 = vmul.f32 %v308, 0.6931472
  %v310 = vlog2.pop %v225
  %v311 = vmul.f32 %v310, 0.6931472
  %v312 = vlog2.pop %v300
  %v313 = vmul.f32 %v312, 0.6931472
  %v314 = vlog2.pop %v229
  %v315 = vmul.f32 %v314, 0.6931472
  %v316 = vlog2.pop %v231
  %v317 = vmul.f32 %v316, 0.6931472
  %v318 = vlog2.pop %v305
  %v319 = vmul.f32 %v318, 0.6931472
  %320 = vst [vmem:[%s2] sm:$0xff] %v309
  %321 = vst [vmem:[%s2 + $0x8] sm:$0xff] %v311
  %322 = vst [vmem:[%s2 + $0x10] sm:$0xff] %v313
  %323 = vst [vmem:[%s2 + $0x18] sm:$0xff] %v315
  %324 = vst [vmem:[%s2 + $0x20] sm:$0xff] %v317
  %325 = vst [vmem:[%s2 + $0x28] sm:$0xff] %v319
  // Predicated region
  $region10: #{transitioner_forward.1} parent=0 // pred_check
    _
  $region11: #{transitioner_forward.1} parent=0 // pred_check_branch
    %327 = sbr.rel (0) target = $region13
  $region12: #{transitioner_forward.1} parent=0 // pred_region
    _
  $region13: #{transitioner_forward.1} parent=0 // pred_fallthru
    _
  // Predicated region
  $region14: #{transitioner_forward.1} parent=0 // pred_check
    _
  $region15: #{transitioner_forward.1} parent=0 // pred_check_branch
    %329 = sbr.rel (0) target = $region17
  $region16: #{transitioner_forward.1} parent=0 // pred_region
    _
  $region17: #{transitioner_forward.1} parent=0 // pred_fallthru
    _

</llo_original>
